<compile_context>
chip_gen: v6e
topology: v6e:2x2x1
jax: 0.10.0
libtpu: 0.0.40
codegen_flags: <defaults>
</compile_context>

<pallas_src>
import functools

import jax
import jax.numpy as jnp
from jax.experimental import pallas as pl
from jax.experimental.pallas import tpu as pltpu


_T_CAP = 8192   # lane-tile cap (bounds unrolled chunk-add count / code size)


@functools.lru_cache(maxsize=None)
def _vmem_limit_bytes():
    """Generation-aware scoped-VMEM limit: ~3/4 of physical VMEM.
    v5e/v6e (128 MiB physical) -> 96 MiB; v7x (64 MiB physical) -> 48 MiB."""
    cap = 64 * 1024 * 1024  # conservative fallback (v7x physical size)
    try:
        info = pltpu.get_tpu_info()
        cap = int(getattr(info, "vmem_capacity_bytes", cap))
    except Exception:
        pass
    return max(32 * 1024 * 1024, min((cap * 3) // 4, 100 * 1024 * 1024))


@functools.lru_cache(maxsize=None)
def _block_budget_bytes():
    # rescale double-buffers in + out (~4x block) + small extras -> limit/6
    return _vmem_limit_bytes() // 6


def _choose_tile(rows, HW, itemsize):
    """Spatial (lane) tile: either the full HW, or a multiple of 128 sized so
    one (1, rows, T) block stays within the per-block byte budget."""
    t = _block_budget_bytes() // max(1, rows * itemsize)
    t = min(t, _T_CAP, HW)
    if t >= HW:
        return HW
    return max(128, (t // 128) * 128)


# --------------------------- 1) tiled GAP ---------------------------------- #

def _gap(x_flat, tile=None):
    """x_flat: (B, C, HW) native dtype -> (B, C) f32 spatial mean."""
    B, C, HW = x_flat.shape
    T = tile if tile is not None else _choose_tile(C, HW, x_flat.dtype.itemsize)
    T = min(T, HW)
    n_t = pl.cdiv(HW, T)
    inv_hw = 1.0 / float(HW)
    vmem_limit = _vmem_limit_bytes()

    if n_t == 1:
        # Single spatial tile: direct reduction, no scratch / mask needed.
        def kernel(x_ref, o_ref):
            x = x_ref[...].astype(jnp.float32)                   # (1, C, HW)
            o_ref[...] = jnp.sum(x, axis=-1, keepdims=True) * inv_hw

        out = pl.pallas_call(
            kernel,
            out_shape=jax.ShapeDtypeStruct((B, C, 1), jnp.float32),
            grid=(B,),
            in_specs=[pl.BlockSpec((1, C, HW), lambda b: (b, 0, 0))],
            out_specs=pl.BlockSpec((1, C, 1), lambda b: (b, 0, 0)),
            compiler_params=pltpu.CompilerParams(
                dimension_semantics=("parallel",),
                vmem_limit_bytes=vmem_limit),
        )(x_flat)
        return out.reshape(B, C)

    # Multi-tile: T is a multiple of 128 by construction.
    assert T % 128 == 0
    need_mask = (HW % T) != 0
    n_chunks = T // 128

    def kernel(x_ref, o_ref, acc_ref):
        k = pl.program_id(1)

        @pl.when(k == 0)
        def _():
            acc_ref[...] = jnp.zeros_like(acc_ref)

        def accumulate(x):
            # Lane-aligned 128-chunk adds: stays on the VALU; the single XLU
            # cross-lane reduce happens only once per batch row (finalize).
            partial = x[:, :, 0:128]
            for c in range(1, n_chunks):
                partial = partial + x[:, :, c * 128:(c + 1) * 128]
            acc_ref[...] += partial

        def finalize():
            o_ref[...] = jnp.sum(acc_ref[...], axis=-1, keepdims=True) * inv_hw

        if need_mask:
            # Mask only on the (partial) last tile; all other tiles skip the
            # iota/compare/select entirely.
            @pl.when(k < n_t - 1)
            def _():
                accumulate(x_ref[...].astype(jnp.float32))

            @pl.when(k == n_t - 1)
            def _():
                x = x_ref[...].astype(jnp.float32)
                lane = jax.lax.broadcasted_iota(jnp.int32, x.shape, 2)
                x = jnp.where(k * T + lane < HW, x, 0.0)
                accumulate(x)
                finalize()
        else:
            accumulate(x_ref[...].astype(jnp.float32))

            @pl.when(k == n_t - 1)
            def _():
                finalize()

    out = pl.pallas_call(
        kernel,
        out_shape=jax.ShapeDtypeStruct((B, C, 1), jnp.float32),
        grid=(B, n_t),
        in_specs=[pl.BlockSpec((1, C, T), lambda b, k: (b, 0, k))],
        out_specs=pl.BlockSpec((1, C, 1), lambda b, k: (b, 0, 0)),
        scratch_shapes=[pltpu.VMEM((1, C, 128), jnp.float32)],
        compiler_params=pltpu.CompilerParams(
            dimension_semantics=("parallel", "arbitrary"),
            vmem_limit_bytes=vmem_limit),
    )(x_flat)
    return out.reshape(B, C)


# --------------- 2) fused sum-over-scales + Linear(C -> S*C) ---------------- #

def _fc(gaps, fc_weight, fc_bias):
    """gaps: list of S (B, C) f32; fc_weight: (S*C, C) torch layout;
    fc_bias: (S*C,).  Returns (B, S*C) f32.  Blocked over S*C for robustness
    when the weight would not fit VMEM un-gridded."""
    S = len(gaps)
    B, C = gaps[0].shape
    out_dim = fc_weight.shape[0]

    # cap the weight block at ~8 MiB; rows multiple of 128 (or full dim)
    max_rows = max(128, ((8 * 1024 * 1024)
                         // max(1, C * fc_weight.dtype.itemsize)) // 128 * 128)
    t_out = out_dim if out_dim <= max_rows else max_rows
    n_o = pl.cdiv(out_dim, t_out)

    def kernel(*refs):
        g_refs = refs[:S]
        w_ref, b_ref, o_ref = refs[S], refs[S + 1], refs[S + 2]
        merged = g_refs[0][...].astype(jnp.float32)
        for g in g_refs[1:]:
            merged = merged + g[...].astype(jnp.float32)         # (B, C) f32
        w = w_ref[...].astype(jnp.float32)                       # (t_out, C)
        # contract merged's C against fc_weight's dim 1 (MXU handles transpose)
        o_ref[...] = jax.lax.dot_general(
            merged, w,
            dimension_numbers=(((1,), (1,)), ((), ())),
            preferred_element_type=jnp.float32,
        ) + b_ref[...].astype(jnp.float32)

    gap_spec = pl.BlockSpec((B, C), lambda j: (0, 0))
    return pl.pallas_call(
        kernel,
        out_shape=jax.ShapeDtypeStruct((B, out_dim), jnp.float32),
        grid=(n_o,),
        in_specs=[gap_spec] * S + [
            pl.BlockSpec((t_out, C), lambda j: (j, 0)),
            pl.BlockSpec((1, t_out), lambda j: (0, j)),
        ],
        out_specs=pl.BlockSpec((B, t_out), lambda j: (0, j)),
        compiler_params=pltpu.CompilerParams(
            dimension_semantics=("parallel",),
            vmem_limit_bytes=_vmem_limit_bytes()),
    )(*gaps, fc_weight, fc_bias.reshape(1, -1))


# ------------------ 3) tiled per-scale channel rescale ---------------------- #

def _rescale(x_flat, scale_bc1, tile=None):
    """x_flat: (B, C, HW) native dtype; scale_bc1: (B, C, 1) in the SAME
    dtype (sliced/cast/laid out once in the wrapper).  Native-dtype multiply;
    garbage lanes of a partial last tile are only written to out-of-bounds
    lanes, which Pallas drops on writeback."""
    B, C, HW = x_flat.shape
    T = tile if tile is not None else _choose_tile(C, HW, x_flat.dtype.itemsize)
    T = min(T, HW)
    n_t = pl.cdiv(HW, T)

    def kernel(x_ref, s_ref, o_ref):
        o_ref[...] = x_ref[...] * s_ref[...]        # (1,C,T) * (1,C,1), native

    return pl.pallas_call(
        kernel,
        out_shape=jax.ShapeDtypeStruct((B, C, HW), x_flat.dtype),
        grid=(B, n_t),
        in_specs=[pl.BlockSpec((1, C, T), lambda b, k: (b, 0, k)),
                  pl.BlockSpec((1, C, 1), lambda b, k: (b, 0, 0))],
        out_specs=pl.BlockSpec((1, C, T), lambda b, k: (b, 0, k)),
        compiler_params=pltpu.CompilerParams(
            dimension_semantics=("parallel", "parallel"),
            vmem_limit_bytes=_vmem_limit_bytes()),
    )(x_flat, scale_bc1)


# ------------------------------ wrapper ------------------------------------- #

def scale_aggregation_fusion(feature_list, fc_weight, fc_bias):
    """feature_list: list of S NCHW arrays (B, C, Hi, Wi), same B and C.
    fc_weight: (S*C, C) in PyTorch Linear layout, fc_bias: (S*C,).
    Returns (mul_feature_list, scale_weights) matching the torch module."""
    B, C = feature_list[0].shape[:2]
    # reshape is metadata-only (contiguous collapse); dtype kept native.
    flats = [f.reshape(B, C, -1) for f in feature_list]

    # 1) per-scale tiled GAP (f32 accumulation inside the kernel)
    # note: per-scale calls could be fused into one pallas_call via scalar
    # prefetch to amortize launch overhead on tiny FPN levels (perf-only).
    gaps = [_gap(x) for x in flats]                              # S x (B, C) f32

    # 2) sum over scales + Linear, fused in one Pallas kernel
    scale_weights = _fc(gaps, fc_weight, fc_bias)                # (B, S*C) f32

    # 3) per-scale channel-wise rescaling (spatially tiled, pipelined).
    # Slice + cast + C-on-sublanes layout of the per-scale weight happens once
    # here on a tiny (B, C) tensor, keeping the hot kernel loop-invariant-free.
    mul_features = []
    for i, (x, f) in enumerate(zip(flats, feature_list)):
        s = scale_weights[:, i * C:(i + 1) * C].astype(f.dtype)[:, :, None]
        mul_features.append(_rescale(x, s).reshape(f.shape))
    return mul_features, scale_weights


# -------------------------------- main -------------------------------------- #

if __name__ == "__main__":
    B, C, S = 2, 4, 2
    key = jax.random.PRNGKey(0)
    k1, k2, k3, k4 = jax.random.split(key, 4)

    # two scales with different spatial sizes (like an FPN)
    f0 = jax.random.normal(k1, (B, C, 16, 16), jnp.float32)
    f1 = jax.random.normal(k2, (B, C, 8, 8), jnp.float32)
    feature_list = [f0, f1]

    # deterministic Linear(C, S*C) params (PyTorch-default-style uniform init)
    bound = 1.0 / (C ** 0.5)
    fc_weight = jax.random.uniform(k3, (S * C, C), jnp.float32, -bound, bound)
    fc_bias = jax.random.uniform(k4, (S * C,), jnp.float32, -bound, bound)

    mul_features, scale_weights = scale_aggregation_fusion(
        feature_list, fc_weight, fc_bias
    )
    jax.block_until_ready(scale_weights)
    jax.block_until_ready(mul_features)

    # plain-JAX reference check of the exact torch forward semantics
    gaps_ref = [f.mean(axis=(2, 3)) for f in feature_list]          # (B, C)
    merged_ref = gaps_ref[0] + gaps_ref[1]                          # sum over stack dim
    weights_ref = merged_ref @ fc_weight.T + fc_bias                # (B, S*C)
    feats_ref = [
        f * weights_ref[:, i * C:(i + 1) * C][:, :, None, None]
        for i, f in enumerate(feature_list)
    ]
    assert jnp.allclose(scale_weights, weights_ref, atol=1e-5, rtol=1e-5)
    for got, ref in zip(mul_features, feats_ref):
        assert got.shape == ref.shape and got.dtype == ref.dtype
        assert jnp.allclose(got, ref, atol=1e-5, rtol=1e-5)

    # extra coverage: force the multi-tile (pipelined) GAP / rescale paths,
    # including a partial masked last tile (HW = 18*18 = 324, T = 128)
    k5, k6 = jax.random.split(k1)
    fbig = jax.random.normal(k5, (B, C, 18, 18), jnp.float32)
    xbig = fbig.reshape(B, C, -1)
    g_tiled = _gap(xbig, tile=128)
    assert jnp.allclose(g_tiled, fbig.mean(axis=(2, 3)), atol=1e-5, rtol=1e-5)
    sbig = jax.random.normal(k6, (B, C), jnp.float32)[:, :, None]
    r_tiled = _rescale(xbig, sbig, tile=128)
    assert jnp.allclose(r_tiled, xbig * sbig, atol=1e-5, rtol=1e-5)
    jax.block_until_ready(r_tiled)

    print("KERNEL_OK")
</pallas_src>

<mosaic_0001>
module attributes {stable_mosaic.version = 11 : i64} {
  func.func @kernel(%arg0: i32, %arg1: memref<1x4x256xf32, #tpu.memory_space<vmem>>, %arg2: memref<1x4x1xf32, #tpu.memory_space<vmem>>) attributes {dimension_semantics = [#tpu.dimension_semantics<parallel>], iteration_bounds = array<i64: 2>, scalar_prefetch = 0 : i64, scratch_operands = 0 : i64, tpu.core_type = #tpu.core_type<tc>, window_params = [{transform_indices = @transform_0, window_bounds = array<i64: 1, 4, 256>}, {transform_indices = @transform_1, window_bounds = array<i64: 1, 4, 1>}]} {
    %c0 = arith.constant 0 : index
    %c0_0 = arith.constant 0 : index
    %c0_1 = arith.constant 0 : index
    %0 = vector.load %arg1[%c0, %c0_0, %c0_1] : memref<1x4x256xf32, #tpu.memory_space<vmem>>, vector<1x4x256xf32>
    %cst = arith.constant dense<0.000000e+00> : vector<1x4xf32>
    %1 = vector.multi_reduction <add>, %0, %cst [2] : vector<1x4x256xf32> to vector<1x4xf32>
    %2 = vector.shape_cast %1 : vector<1x4xf32> to vector<1x4x1xf32>
    %cst_2 = arith.constant 3.906250e-03 : f32
    %3 = vector.broadcast %cst_2 : f32 to vector<1x4x1xf32>
    %4 = arith.mulf %2, %3 : vector<1x4x1xf32>
    %c0_3 = arith.constant 0 : index
    %c0_4 = arith.constant 0 : index
    %c0_5 = arith.constant 0 : index
    %5 = vector.load %arg2[%c0_3, %c0_4, %c0_5] : memref<1x4x1xf32, #tpu.memory_space<vmem>>, vector<1x4x1xf32>
    tpu.vector_store %arg2[%c0_3, %c0_4, %c0_5], %4 {strides = array<i32>} : memref<1x4x1xf32, #tpu.memory_space<vmem>>, vector<1x4x1xf32>,
    return
  }
  func.func @transform_0(%arg0: i32) -> (i32, i32, i32) {
    %c0_i32 = arith.constant 0 : i32
    %c0_i32_0 = arith.constant 0 : i32
    %c0_i32_1 = arith.constant 0 : i32
    return %arg0, %c0_i32, %c0_i32_0 : i32, i32, i32
  }
  func.func @transform_1(%arg0: i32) -> (i32, i32, i32) {
    %c0_i32 = arith.constant 0 : i32
    %c0_i32_0 = arith.constant 0 : i32
    %c0_i32_1 = arith.constant 0 : i32
    return %arg0, %c0_i32, %c0_i32_0 : i32, i32, i32
  }
}

</mosaic_0001>

<llo_original>
// kernel: tpu_custom_call.1
$region0: #{tpu_custom_call.1}
  #allocation0 [shape = 'u32[]', space=smem, size = 0x4, offset = 0x4, fixed_abs, tag = 'smem constant byte address 0x4 - core index']
  #allocation1 [shape = 'u32[144,128]{1,0:T(1,128)}', space=vmem, size = 0x12000, scoped, tag = 'internal scratch']
  %s0 = inlined_call_operand.hbm [shape: f32[2,4,256], index: 0, kind: input, shape index: {}]
  %s1 = inlined_call_operand.vmem [shape: f32[2,4,1], index: 1, kind: output, shape index: {}]
  %s2 = sld [smem:[#allocation0]]
  $region41: #{tpu_custom_call.1} parent=0
    _
  %s4 = ssub.s32 1, %s2
  %s5 = scalar_select 0, %s4, %s2
  $region1: #{tpu_custom_call.1} parent=0
    #allocation2 [shape = 'u8[8192]{0}', space=vmem, size = 0x2000, scoped, tag = 'input window, operand 0']
    #allocation3 [shape = 's32[2]{0}', space=sflag, size = 0x8, scoped, tag = 'scoped memory for tpu_custom_call.1']
    %6 = vsyncpa [#allocation3], 0
    %s7 = scalar_lea.sflag [#allocation3], 1
    %8 = vsyncpa %s7, 0
    loop: start=0, step=1, limit=4
    $region2: #{tpu_custom_call.1} parent=1 // loop_pre_header
      _
    $region3: #{tpu_custom_call.1} parent=1 // loop_header
      %s10 = sphi 0, %s14
      %p11 = scmp.ge.s32.totalorder %s10, 4
      %s20 = sphi 0, %s22
      %s23 = sphi 0, %s20
      %s24 = sphi 0, %s23
      %s40 = sphi 0, %s24
      %s46 = sphi 0, %s48
      %s49 = sphi 0, %s46
      %s50 = sphi 0, %s49
      %s66 = sphi 0, %s50
    $region4: #{tpu_custom_call.1} parent=1 // loop_header_branch
      %13 = sbr.rel (%p11) target = $region8
    $region5: #{tpu_custom_call.1} parent=1 // loop_body
      %s15 = ssub.s32 %s10, 1
      %s16 = ssub.s32 %s10, 2
      %s17 = sadd.s32 %s10, 1
      %s18 = ssub.s32 %s10, %s17
      %p19 = scmp.eq.s32.totalorder %s18, 0
      %s21 = sadd.s32 %s20, 1
      %s22 = scalar_select %p19, %s20, %s21
      %p25 = pneg %p19
      %p26 = scmp.eq.s32.totalorder %s10, 1
      %p27 = por %p25, %p26
      %p28 = scmp.ne.s32.totalorder %s20, %s23
      %p29 = scmp.eq.s32.totalorder %s10, 0
      %p30 = por %p28, %p29
      %p31 = scmp.ne.s32.totalorder %s20, %s23
      %p32 = scmp.eq.s32.totalorder %s15, 1
      %p33 = por %p31, %p32
      %p34 = scmp.ne.s32.totalorder %s23, %s24
      %p35 = scmp.eq.s32.totalorder %s15, 0
      %p36 = por %p34, %p35
      %p37 = scmp.ne.s32.totalorder %s23, %s24
      %p38 = scmp.eq.s32.totalorder %s16, 1
      %p39 = por %p37, %p38
      %p41 = scmp.ne.s32.totalorder %s24, %s40
      %p42 = scmp.eq.s32.totalorder %s16, 0
      %p43 = por %p41, %p42
      %s44 = ssub.s32 %s10, %s17
      %p45 = scmp.eq.s32.totalorder %s44, 0
      %s47 = sadd.s32 %s46, 1
      %s48 = scalar_select %p45, %s46, %s47
      %p51 = pneg %p45
      %p52 = scmp.eq.s32.totalorder %s10, 1
      %p53 = por %p51, %p52
      %p54 = scmp.ne.s32.totalorder %s46, %s49
      %p55 = scmp.eq.s32.totalorder %s10, 0
      %p56 = por %p54, %p55
      %p57 = scmp.ne.s32.totalorder %s46, %s49
      %p58 = scmp.eq.s32.totalorder %s15, 1
      %p59 = por %p57, %p58
      %p60 = scmp.ne.s32.totalorder %s49, %s50
      %p61 = scmp.eq.s32.totalorder %s15, 0
      %p62 = por %p60, %p61
      %p63 = scmp.ne.s32.totalorder %s49, %s50
      %p64 = scmp.eq.s32.totalorder %s16, 1
      %p65 = por %p63, %p64
      %p67 = scmp.ne.s32.totalorder %s50, %s66
      %p68 = scmp.eq.s32.totalorder %s16, 0
      %p69 = por %p67, %p68
      %p70 = scmp.le.s32.totalorder 1, %s10
      %p71 = scmp.lt.s32.totalorder %s10, 3
      %p72 = pnand %p70, %p71
      %p73 = pneg %p72
      // Predicated region
      $region9: #{tpu_custom_call.1} parent=5 // pred_check
        _
      $region10: #{tpu_custom_call.1} parent=5 // pred_check_branch
        %75 = sbr.rel (%p72) target = $region12
      $region11: #{tpu_custom_call.1} parent=5 // pred_region
        %s76 = ssub.s32 %s10, 1
      $region12: #{tpu_custom_call.1} parent=5 // pred_fallthru
        _
      %p77 = scmp.lt.s32.totalorder %s10, 2
      // Predicated region
      $region13: #{tpu_custom_call.1} parent=5 // pred_check
        %p78 = pneg %p77
      $region14: #{tpu_custom_call.1} parent=5 // pred_check_branch
        %80 = sbr.rel (%p78) target = $region16
      $region15: #{tpu_custom_call.1} parent=5 // pred_region
        // Predicated region
        $region17: #{tpu_custom_call.1} parent=15 // pred_check
          %p81 = pneg %p30
        $region18: #{tpu_custom_call.1} parent=15 // pred_check_branch
          %83 = sbr.rel (%p81) target = $region20
        $region19: #{tpu_custom_call.1} parent=15 // pred_region
          %s84 = sand.u32 %s20, 1
          %s85 = scalar_lea.sflag [#allocation3], %s84
          %s86 = sand.u32 %s20, 1
          %s87 = smul.addr %s86, 8
          %s88 = scalar_lea.vmem [#allocation2], %s87
          %s90 = ssub.s32 128, 128
          %91 = vsyncadd %s85, %s90
          %s92 = smul.addr %s10, 2
          %s93 = smul.addr %s92, 64
          %s94 = scalar_lea.hbm %s0, %s93
          %s96 = sshll.u32 %s88, 4
          %s97 = int_to_ptr.vmem [resolvable:$true] %s96
          %99 = dma.hbm_to_vmem [thread:$0]  %s94, 128, %s97, %s85
        $region20: #{tpu_custom_call.1} parent=15 // pred_fallthru
          _
      $region16: #{tpu_custom_call.1} parent=5 // pred_fallthru
        _
      %p100 = scmp.le.s32.totalorder 1, %s10
      %p101 = scmp.lt.s32.totalorder %s10, 3
      %p102 = pnand %p100, %p101
      %p103 = pneg %p102
      // Predicated region
      $region21: #{tpu_custom_call.1} parent=5 // pred_check
        _
      $region22: #{tpu_custom_call.1} parent=5 // pred_check_branch
        %105 = sbr.rel (%p102) target = $region24
      $region23: #{tpu_custom_call.1} parent=5 // pred_region
        %s106 = ssub.s32 %s10, 1
        %s107 = sand.u32 %s23, 1
        %s108 = scalar_lea.sflag [#allocation3], %s107
        %s109 = sand.u32 %s23, 1
        %s110 = smul.addr %s109, 8
        %s111 = scalar_lea.vmem [#allocation2], %s110
        // Predicated region
        $region25: #{tpu_custom_call.1} parent=23 // pred_check
          %p112 = pneg %p36
        $region26: #{tpu_custom_call.1} parent=23 // pred_check_branch
          %114 = sbr.rel (%p112) target = $region28
        $region27: #{tpu_custom_call.1} parent=23 // pred_region
          %115 = dma.done %s108, 128
        $region28: #{tpu_custom_call.1} parent=23 // pred_fallthru
          _
        %s116 = sand.u32 %s23, 1
        %s117 = scalar_lea.sflag [#allocation3], %s116
        %s118 = sand.u32 %s23, 1
        %s119 = smul.addr %s118, 8
        %s120 = scalar_lea.vmem [#allocation2], %s119
        %p121 = pneg %p36
        %p122 = pneg %p33
        %p123 = pneg %p62
        %p124 = pneg %p59
        %p125 = scmp.lt.s32.totalorder %s15, 1
        %s126 = scalar_select %p125, %s15, 1
        %s127 = smul.addr %s126, 4
        %s128 = scalar_lea.vmem %s1, %s127
        %p129 = scmp.lt.s32.totalorder %s15, 1
        %s130 = scalar_select %p129, %s15, 1
        %s131 = smul.addr %s130, 4
        %s132 = scalar_lea.vmem %s1, %s131
        %v133 = vld [vmem:[%s111] sm:$0xff]
        %v135 = vcombine.high %v133, %v133
        %vm137 = vcmask 1043456
        %v138 = vsel %vm137, %v133, 0.0
        %v139 = vsel %vm137, %v135, 0.0
        %v140 = vadd.f32 %v138, %v139
        %141 = vadd.xlane.f32.xlu0 %v140
        %v142 = vpop.xlane.xlu0 %141
        %v143 = vmul.f32 %v142, 0.00390625
        %vm144 = vcmask 3072
        %145 = vst.msk [vmem:[%s132] sm:$0xf] %vm144, %v143
        %p146 = scmp.lt.s32.totalorder %s15, 1
        %s147 = scalar_select %p146, %s15, 1
        %s148 = smul.addr %s147, 4
        %s149 = scalar_lea.vmem %s1, %s148
        // Predicated region
        $region29: #{tpu_custom_call.1} parent=23 // pred_check
          %p150 = pneg %p59
        $region30: #{tpu_custom_call.1} parent=23 // pred_check_branch
          %152 = sbr.rel (%p150) target = $region32
        $region31: #{tpu_custom_call.1} parent=23 // pred_region
          _
        $region32: #{tpu_custom_call.1} parent=23 // pred_fallthru
          _
      $region24: #{tpu_custom_call.1} parent=5 // pred_fallthru
        _
      %p153 = scmp.le.s32.totalorder 2, %s10
      // Predicated region
      $region33: #{tpu_custom_call.1} parent=5 // pred_check
        %p154 = pneg %p153
      $region34: #{tpu_custom_call.1} parent=5 // pred_check_branch
        %156 = sbr.rel (%p154) target = $region36
      $region35: #{tpu_custom_call.1} parent=5 // pred_region
        %s157 = ssub.s32 %s10, 2
        // Predicated region
        $region37: #{tpu_custom_call.1} parent=35 // pred_check
          %p158 = pneg %p65
        $region38: #{tpu_custom_call.1} parent=35 // pred_check_branch
          %160 = sbr.rel (%p158) target = $region40
        $region39: #{tpu_custom_call.1} parent=35 // pred_region
          %p161 = scmp.lt.s32.totalorder %s16, 1
          %s162 = scalar_select %p161, %s16, 1
          %s163 = smul.addr %s162, 4
          %s164 = scalar_lea.vmem %s1, %s163
        $region40: #{tpu_custom_call.1} parent=35 // pred_fallthru
          _
      $region36: #{tpu_custom_call.1} parent=5 // pred_fallthru
        _
    $region6: #{tpu_custom_call.1} parent=1 // loop_footer
      %s14 = sadd.s32 1, %s10
    $region7: #{tpu_custom_call.1} parent=1 // loop_footer_branch
      %9 = sbr.rel target = $region3
    $region8: #{tpu_custom_call.1} parent=1 // loop_exit
      _
    %165 = vsyncpa [#allocation3], 1
    %s166 = scalar_lea.sflag [#allocation3], 1
    %167 = vsyncpa %s166, 1

</llo_original>
